<compile_context>
chip_gen: v7x
topology: tpu7x:2x2x1
jax: 0.10.0
libtpu: 0.0.40
codegen_flags: <defaults>
</compile_context>

<pallas_src>
import jax
import jax.numpy as jnp
from jax import lax
from jax.experimental import pallas as pl
from jax.experimental.pallas import tpu as pltpu


def _round_up(x, m):
    return ((x + m - 1) // m) * m


# ----------------------------------------------------------------------------
# Pallas kernel: fused (x @ W1x + W_task[task]) -> LeakyReLU(0.2) -> @ W2 + b2
# ----------------------------------------------------------------------------
def _translator_kernel(x_ref, task_ref, w1x_ref, wt_ref, w2_ref, b2_ref, o_ref):
    # Per grid step:
    #   x_ref   : (TM, L)          activations
    #   task_ref: (TM, 1)   int32  task ids
    #   w1x_ref : (L, H)           first-layer weight, x-part       (H = 4L)
    #   wt_ref  : (NE, H)          fused rows: embedding @ W1_emb + b1
    #   w2_ref  : (H, NP)          second-layer weight, lane-padded (NP % 128 == 0)
    #   b2_ref  : (1, NP)          lane-padded bias
    #   o_ref   : (TM, NP)         lane-dense output (sliced to L in wrapper)
    cdt = w1x_ref.dtype  # compute dtype for MXU operands (f32 or bf16)

    x = x_ref[...].astype(cdt)

    # one_hot(task) @ W_task  ==  gather of the fused per-task row, done on the
    # MXU instead of a data-dependent gather.
    tm = x_ref.shape[0]
    ne = wt_ref.shape[0]
    iota = lax.broadcasted_iota(jnp.int32, (tm, ne), 1)
    onehot = (task_ref[...] == iota).astype(cdt)

    h = jnp.dot(x, w1x_ref[...], preferred_element_type=jnp.float32)
    h = h + jnp.dot(onehot, wt_ref[...], preferred_element_type=jnp.float32)
    # LeakyReLU(negative_slope=0.2) in f32 on the VPU.
    h = jnp.where(h > 0, h, 0.2 * h)

    out = jnp.dot(h.astype(cdt), w2_ref[...], preferred_element_type=jnp.float32)
    out = out + b2_ref[...].astype(jnp.float32)
    o_ref[...] = out.astype(o_ref.dtype)


# ----------------------------------------------------------------------------
# Wrapper
# ----------------------------------------------------------------------------
def translator_forward(kparams, x, task_id, *, block_rows=128):
    """Fused Translator forward. `kparams` comes from prepare_translator_params."""
    w1x = kparams["w1x"]     # (L, H)
    wt = kparams["wt"]       # (NE, H)
    w2p = kparams["w2p"]     # (H, NP)
    b2p = kparams["b2p"]     # (1, NP)
    L, H = w1x.shape
    NE = wt.shape[0]
    NP = w2p.shape[1]
    B = x.shape[0]
    out_dtype = x.dtype

    # Batch tile: 128 rows when the batch is large (MXU-optimal on v5e, fine on
    # v6e/v7x), otherwise the batch rounded up to a sublane multiple.
    TM = block_rows if B >= block_rows else _round_up(max(B, 1), 8)
    B_pad = _round_up(B, TM)

    task2d = task_id.astype(jnp.int32).reshape(B, 1)
    if B_pad != B:
        x = jnp.pad(x, ((0, B_pad - B), (0, 0)))
        task2d = jnp.pad(task2d, ((0, B_pad - B), (0, 0)))

    grid = (B_pad // TM,)

    flops = 2 * B_pad * (L * H + NE * H + H * NP)
    bytes_accessed = (
        x.size * x.dtype.itemsize
        + task2d.size * task2d.dtype.itemsize
        + w1x.size * w1x.dtype.itemsize
        + wt.size * wt.dtype.itemsize
        + w2p.size * w2p.dtype.itemsize
        + b2p.size * b2p.dtype.itemsize
        + B_pad * NP * jnp.dtype(out_dtype).itemsize
    )

    out_padded = pl.pallas_call(
        _translator_kernel,
        out_shape=jax.ShapeDtypeStruct((B_pad, NP), out_dtype),
        grid=grid,
        in_specs=[
            pl.BlockSpec((TM, L), lambda i: (i, 0)),   # x       (tiled over batch)
            pl.BlockSpec((TM, 1), lambda i: (i, 0)),   # task_id (tiled over batch)
            pl.BlockSpec((L, H), lambda i: (0, 0)),    # w1x     (VMEM-resident)
            pl.BlockSpec((NE, H), lambda i: (0, 0)),   # wt      (VMEM-resident)
            pl.BlockSpec((H, NP), lambda i: (0, 0)),   # w2p     (VMEM-resident)
            pl.BlockSpec((1, NP), lambda i: (0, 0)),   # b2p     (VMEM-resident)
        ],
        out_specs=pl.BlockSpec((TM, NP), lambda i: (i, 0)),
        compiler_params=pltpu.CompilerParams(dimension_semantics=("parallel",)),
        cost_estimate=pl.CostEstimate(
            flops=flops, transcendentals=0, bytes_accessed=bytes_accessed
        ),
    )(x, task2d, w1x, wt, w2p, b2p)

    # Drop the batch padding and the lane padding.
    return out_padded[:B, :L]


# ----------------------------------------------------------------------------
# Params: PyTorch-like raw init + one-time fusion/padding for the kernel
# ----------------------------------------------------------------------------
def init_translator_params(key, latent_size, num_embeddings, embedding_dim):
    """PyTorch-default-style init (uniform +-1/sqrt(fan_in) Linear, N(0,1) Emb)."""
    k_emb, k_w1, k_b1, k_w2, k_b2 = jax.random.split(key, 5)
    in1 = latent_size + embedding_dim
    hid = latent_size * 4

    bound1 = 1.0 / jnp.sqrt(in1)
    bound2 = 1.0 / jnp.sqrt(hid)
    return {
        "embedding": jax.random.normal(
            k_emb, (num_embeddings, embedding_dim), dtype=jnp.float32
        ),
        "w1": jax.random.uniform(
            k_w1, (in1, hid), minval=-bound1, maxval=bound1, dtype=jnp.float32
        ),
        "b1": jax.random.uniform(
            k_b1, (hid,), minval=-bound1, maxval=bound1, dtype=jnp.float32
        ),
        "w2": jax.random.uniform(
            k_w2, (hid, latent_size), minval=-bound2, maxval=bound2, dtype=jnp.float32
        ),
        "b2": jax.random.uniform(
            k_b2, (latent_size,), minval=-bound2, maxval=bound2, dtype=jnp.float32
        ),
    }


def prepare_translator_params(params, latent_size, compute_dtype=jnp.float32):
    """One-time (outside the hot path) fusion + padding of the raw parameters.

    - Split W1 into its x-part and embedding-part; fold  embedding @ W1_emb + b1
      into per-task rows W_task  -> kernel needs no gather/concat.
    - Zero-pad W2 / b2 along the output axis to a multiple of 128 lanes so the
      kernel's output stores are lane-dense (unmasked vst).
    - Optionally cast operands to bf16 for v6e/v7x MXU rate (f32 accumulation
      happens in-kernel via preferred_element_type).
    """
    L = latent_size
    w1 = params["w1"]                       # (L+E, 4L)
    w1x = w1[:L, :]                         # (L, 4L)
    w1e = w1[L:, :]                         # (E, 4L)
    wt = params["embedding"] @ w1e + params["b1"][None, :]   # (NE, 4L), fp32 fold

    NP = _round_up(L, 128)
    w2p = jnp.zeros((w1.shape[1], NP), jnp.float32).at[:, :L].set(params["w2"])
    b2p = jnp.zeros((1, NP), jnp.float32).at[0, :L].set(params["b2"])

    return {
        "w1x": w1x.astype(compute_dtype),
        "wt": wt.astype(compute_dtype),
        "w2p": w2p.astype(compute_dtype),
        "b2p": b2p.astype(compute_dtype),
    }


# Pure-JAX reference (mirrors the PyTorch module exactly).
def translator_forward_ref(params, x, task_id):
    emb = jnp.take(params["embedding"], task_id.astype(jnp.int32), axis=0)
    x_cat = jnp.concatenate([x, emb], axis=1)
    h = x_cat @ params["w1"] + params["b1"]
    h = jnp.where(h > 0, h, 0.2 * h)
    return h @ params["w2"] + params["b2"]


if __name__ == "__main__":
    latent_size = 32
    embedding_dim = 16
    num_embeddings = 4
    batch = 8

    key = jax.random.PRNGKey(0)
    k_params, k_x, k_tid = jax.random.split(key, 3)

    params = init_translator_params(
        k_params, latent_size, num_embeddings, embedding_dim
    )
    x = jax.random.normal(k_x, (batch, latent_size), dtype=jnp.float32)
    task_id = jax.random.randint(k_tid, (batch,), 0, num_embeddings)

    ref = translator_forward_ref(params, x, task_id)

    # fp32 path (tight check).
    kparams_f32 = prepare_translator_params(
        params, latent_size, compute_dtype=jnp.float32
    )
    out_f32 = jax.block_until_ready(translator_forward(kparams_f32, x, task_id))
    assert out_f32.shape == (batch, latent_size)
    assert jnp.allclose(out_f32, ref, atol=2e-5, rtol=2e-5)

    # bf16-operand path (v6e/v7x MXU rate), f32 accumulation -> loose check.
    kparams_bf16 = prepare_translator_params(
        params, latent_size, compute_dtype=jnp.bfloat16
    )
    out_bf16 = jax.block_until_ready(translator_forward(kparams_bf16, x, task_id))
    assert out_bf16.shape == (batch, latent_size)
    assert jnp.allclose(out_bf16, ref, atol=1e-1, rtol=1e-1)

    print("KERNEL_OK")
</pallas_src>

<mosaic_0001>
module attributes {stable_mosaic.version = 11 : i64} {
  func.func @_translator_kernel(%arg0: i32, %arg1: memref<8x32xf32, #tpu.memory_space<vmem>>, %arg2: memref<8x1xi32, #tpu.memory_space<vmem>>, %arg3: memref<32x128xf32, #tpu.memory_space<vmem>>, %arg4: memref<4x128xf32, #tpu.memory_space<vmem>>, %arg5: memref<128x128xf32, #tpu.memory_space<vmem>>, %arg6: memref<1x128xf32, #tpu.memory_space<vmem>>, %arg7: memref<8x128xf32, #tpu.memory_space<vmem>>) attributes {dimension_semantics = [#tpu.dimension_semantics<parallel>], iteration_bounds = array<i64: 1>, scalar_prefetch = 0 : i64, scratch_operands = 0 : i64, tpu.core_type = #tpu.core_type<tc>, window_params = [{transform_indices = @transform_0, window_bounds = array<i64: 8, 32>}, {transform_indices = @transform_1, window_bounds = array<i64: 8, 1>}, {pipeline_mode = #tpu.pipeline_mode<synchronous>, transform_indices = @transform_2, window_bounds = array<i64: 32, 128>}, {pipeline_mode = #tpu.pipeline_mode<synchronous>, transform_indices = @transform_3, window_bounds = array<i64: 4, 128>}, {pipeline_mode = #tpu.pipeline_mode<synchronous>, transform_indices = @transform_4, window_bounds = array<i64: 128, 128>}, {pipeline_mode = #tpu.pipeline_mode<synchronous>, transform_indices = @transform_5, window_bounds = array<i64: 1, 128>}, {transform_indices = @transform_6, window_bounds = array<i64: 8, 128>}]} {
    %c0 = arith.constant 0 : index
    %c0_0 = arith.constant 0 : index
    %0 = vector.load %arg1[%c0, %c0_0] : memref<8x32xf32, #tpu.memory_space<vmem>>, vector<8x32xf32>
    %1 = tpu.iota {dimensions = array<i32: 1>} : vector<8x4xi32>
    %c0_1 = arith.constant 0 : index
    %c0_2 = arith.constant 0 : index
    %2 = vector.load %arg2[%c0_1, %c0_2] : memref<8x1xi32, #tpu.memory_space<vmem>>, vector<8x1xi32>
    %3 = vector.broadcast %2 : vector<8x1xi32> to vector<8x4xi32>
    %4 = arith.cmpi eq, %3, %1 : vector<8x4xi32>
    %5 = arith.extui %4 : vector<8x4xi1> to vector<8x4xi32>
    %6 = arith.sitofp %5 : vector<8x4xi32> to vector<8x4xf32>
    %c0_3 = arith.constant 0 : index
    %c0_4 = arith.constant 0 : index
    %7 = vector.load %arg3[%c0_3, %c0_4] : memref<32x128xf32, #tpu.memory_space<vmem>>, vector<32x128xf32>
    %cst = arith.constant dense<0.000000e+00> : vector<8x128xf32>
    %8 = tpu.matmul %0, %7, %cst {dimension_numbers = #tpu.dot_dimension_numbers<[1], [0], [0], [1], [0, 0, 1, 1], [], []>} : vector<8x32xf32>, vector<32x128xf32>, vector<8x128xf32> -> vector<8x128xf32>
    %c0_5 = arith.constant 0 : index
    %c0_6 = arith.constant 0 : index
    %9 = vector.load %arg4[%c0_5, %c0_6] : memref<4x128xf32, #tpu.memory_space<vmem>>, vector<4x128xf32>
    %cst_7 = arith.constant dense<0.000000e+00> : vector<8x128xf32>
    %10 = tpu.matmul %6, %9, %cst_7 {dimension_numbers = #tpu.dot_dimension_numbers<[1], [0], [0], [1], [0, 0, 1, 1], [], []>} : vector<8x4xf32>, vector<4x128xf32>, vector<8x128xf32> -> vector<8x128xf32>
    %11 = arith.addf %8, %10 : vector<8x128xf32>
    %cst_8 = arith.constant 0.000000e+00 : f32
    %12 = vector.broadcast %cst_8 : f32 to vector<8x128xf32>
    %13 = arith.cmpf ogt, %11, %12 : vector<8x128xf32>
    %cst_9 = arith.constant 2.000000e-01 : f32
    %14 = vector.broadcast %cst_9 : f32 to vector<8x128xf32>
    %15 = arith.mulf %14, %11 : vector<8x128xf32>
    %16 = arith.select %13, %11, %15 : vector<8x128xi1>, vector<8x128xf32>
    %c0_10 = arith.constant 0 : index
    %c0_11 = arith.constant 0 : index
    %17 = vector.load %arg5[%c0_10, %c0_11] : memref<128x128xf32, #tpu.memory_space<vmem>>, vector<128x128xf32>
    %cst_12 = arith.constant dense<0.000000e+00> : vector<8x128xf32>
    %18 = tpu.matmul %16, %17, %cst_12 {dimension_numbers = #tpu.dot_dimension_numbers<[1], [0], [0], [1], [0, 0, 1, 1], [], []>} : vector<8x128xf32>, vector<128x128xf32>, vector<8x128xf32> -> vector<8x128xf32>
    %c0_13 = arith.constant 0 : index
    %c0_14 = arith.constant 0 : index
    %19 = vector.load %arg6[%c0_13, %c0_14] : memref<1x128xf32, #tpu.memory_space<vmem>>, vector<1x128xf32>
    %20 = vector.broadcast %19 : vector<1x128xf32> to vector<8x128xf32>
    %21 = arith.addf %18, %20 : vector<8x128xf32>
    %c0_15 = arith.constant 0 : index
    %c0_16 = arith.constant 0 : index
    %22 = vector.load %arg7[%c0_15, %c0_16] : memref<8x128xf32, #tpu.memory_space<vmem>>, vector<8x128xf32>
    tpu.vector_store %arg7[%c0_15, %c0_16], %21 {strides = array<i32>} : memref<8x128xf32, #tpu.memory_space<vmem>>, vector<8x128xf32>,
    return
  }
  func.func @transform_0(%arg0: i32) -> (i32, i32) {
    %c0_i32 = arith.constant 0 : i32
    %c0_i32_0 = arith.constant 0 : i32
    return %arg0, %c0_i32 : i32, i32
  }
  func.func @transform_1(%arg0: i32) -> (i32, i32) {
    %c0_i32 = arith.constant 0 : i32
    %c0_i32_0 = arith.constant 0 : i32
    return %arg0, %c0_i32 : i32, i32
  }
  func.func @transform_2(%arg0: i32) -> (i32, i32) {
    %c0_i32 = arith.constant 0 : i32
    %c0_i32_0 = arith.constant 0 : i32
    %c0_i32_1 = arith.constant 0 : i32
    return %c0_i32, %c0_i32_0 : i32, i32
  }
  func.func @transform_3(%arg0: i32) -> (i32, i32) {
    %c0_i32 = arith.constant 0 : i32
    %c0_i32_0 = arith.constant 0 : i32
    %c0_i32_1 = arith.constant 0 : i32
    return %c0_i32, %c0_i32_0 : i32, i32
  }
  func.func @transform_4(%arg0: i32) -> (i32, i32) {
    %c0_i32 = arith.constant 0 : i32
    %c0_i32_0 = arith.constant 0 : i32
    %c0_i32_1 = arith.constant 0 : i32
    return %c0_i32, %c0_i32_0 : i32, i32
  }
  func.func @transform_5(%arg0: i32) -> (i32, i32) {
    %c0_i32 = arith.constant 0 : i32
    %c0_i32_0 = arith.constant 0 : i32
    %c0_i32_1 = arith.constant 0 : i32
    return %c0_i32, %c0_i32_0 : i32, i32
  }
  func.func @transform_6(%arg0: i32) -> (i32, i32) {
    %c0_i32 = arith.constant 0 : i32
    %c0_i32_0 = arith.constant 0 : i32
    return %arg0, %c0_i32 : i32, i32
  }
}

</mosaic_0001>

<llo_original>
// kernel: tpu_custom_call.1
$region0: #{tpu_custom_call.1}
  #allocation0 [shape = 'u32[]', space=smem, size = 0x4, offset = 0x4, fixed_abs, tag = 'smem constant byte address 0x4 - core index']
  #allocation1 [shape = 'u32[144,128]{1,0:T(1,128)}', space=vmem, size = 0x12000, scoped, tag = 'internal scratch']
  %s0 = inlined_call_operand.vmem [shape: f32[8,32], index: 0, kind: input, shape index: {}]
  %s1 = inlined_call_operand.vmem [shape: s32[8,1], index: 1, kind: input, shape index: {}]
  %s2 = inlined_call_operand.hbm [shape: f32[32,128], index: 2, kind: input, shape index: {}]
  %s3 = inlined_call_operand.vmem [shape: f32[4,128], index: 3, kind: input, shape index: {}]
  %s4 = inlined_call_operand.hbm [shape: f32[128,128], index: 4, kind: input, shape index: {}]
  %s5 = inlined_call_operand.vmem [shape: f32[1,128], index: 5, kind: input, shape index: {}]
  %s6 = inlined_call_operand.hbm [shape: f32[8,128], index: 6, kind: output, shape index: {}]
  %s7 = sld [smem:[#allocation0]]
  $region42: #{tpu_custom_call.1} parent=0
    _
  %s9 = ssub.s32 1, %s7
  %s10 = scalar_select 0, %s9, %s7
  $region1: #{tpu_custom_call.1} parent=0
    #allocation2 [shape = 'u8[16384]{0}', space=vmem, size = 0x4000, scoped, tag = 'input window, operand 2, single buffered']
    #allocation3 [shape = 's32[1]{0}', space=sflag, size = 0x4, scoped, tag = 'scoped memory for tpu_custom_call.1']
    #allocation4 [shape = 's32[1]{0}', space=sflag, size = 0x4, scoped, tag = 'scoped memory for tpu_custom_call.1']
    #allocation5 [shape = 'u8[65536]{0}', space=vmem, size = 0x10000, scoped, tag = 'input window, operand 4, single buffered']
    #allocation6 [shape = 's32[1]{0}', space=sflag, size = 0x4, scoped, tag = 'scoped memory for tpu_custom_call.1']
    #allocation7 [shape = 'u8[4096]{0}', space=vmem, size = 0x1000, scoped, tag = 'output window, operand 0, single buffered']
    %11 = vsyncpa [#allocation3], 0
    %12 = vsyncpa [#allocation6], 0
    %13 = vsyncpa [#allocation4], 0
    // Predicated region
    $region2: #{tpu_custom_call.1} parent=1 // pred_check
      _
    $region3: #{tpu_custom_call.1} parent=1 // pred_check_branch
      %15 = sbr.rel (0) target = $region5
    $region4: #{tpu_custom_call.1} parent=1 // pred_region
      _
    $region5: #{tpu_custom_call.1} parent=1 // pred_fallthru
      _
    // Predicated region
    $region6: #{tpu_custom_call.1} parent=1 // pred_check
      _
    $region7: #{tpu_custom_call.1} parent=1 // pred_check_branch
      %17 = sbr.rel (0) target = $region9
    $region8: #{tpu_custom_call.1} parent=1 // pred_region
      _
    $region9: #{tpu_custom_call.1} parent=1 // pred_fallthru
      _
    // Predicated region
    $region10: #{tpu_custom_call.1} parent=1 // pred_check
      _
    $region11: #{tpu_custom_call.1} parent=1 // pred_check_branch
      %19 = sbr.rel (0) target = $region13
    $region12: #{tpu_custom_call.1} parent=1 // pred_region
      %s21 = ssub.s32 512, 512
      %22 = vsyncadd [#allocation3], %s21
      %s23 = sshll.u32 [#allocation2], 4
      %s24 = int_to_ptr.vmem [resolvable:$true] %s23
      %29 = dma.hbm_to_vmem [thread:$0]  %s2, 512, %s24, [#allocation3], 128, 128, 8
    $region13: #{tpu_custom_call.1} parent=1 // pred_fallthru
      _
    // Predicated region
    $region14: #{tpu_custom_call.1} parent=1 // pred_check
      _
    $region15: #{tpu_custom_call.1} parent=1 // pred_check_branch
      %31 = sbr.rel (0) target = $region17
    $region16: #{tpu_custom_call.1} parent=1 // pred_region
      _
    $region17: #{tpu_custom_call.1} parent=1 // pred_fallthru
      _
    // Predicated region
    $region18: #{tpu_custom_call.1} parent=1 // pred_check
      _
    $region19: #{tpu_custom_call.1} parent=1 // pred_check_branch
      %33 = sbr.rel (0) target = $region21
    $region20: #{tpu_custom_call.1} parent=1 // pred_region
      %s35 = ssub.s32 2048, 2048
      %36 = vsyncadd [#allocation6], %s35
      %s37 = sshll.u32 [#allocation5], 4
      %s38 = int_to_ptr.vmem [resolvable:$true] %s37
      %43 = dma.hbm_to_vmem [thread:$0]  %s4, 2048, %s38, [#allocation6], 128, 128, 8
    $region21: #{tpu_custom_call.1} parent=1 // pred_fallthru
      _
    // Predicated region
    $region22: #{tpu_custom_call.1} parent=1 // pred_check
      _
    $region23: #{tpu_custom_call.1} parent=1 // pred_check_branch
      %45 = sbr.rel (0) target = $region25
    $region24: #{tpu_custom_call.1} parent=1 // pred_region
      _
    $region25: #{tpu_custom_call.1} parent=1 // pred_fallthru
      _
    // Predicated region
    $region26: #{tpu_custom_call.1} parent=1 // pred_check
      _
    $region27: #{tpu_custom_call.1} parent=1 // pred_check_branch
      %47 = sbr.rel (0) target = $region29
    $region28: #{tpu_custom_call.1} parent=1 // pred_region
      %48 = dma.done [#allocation3], 512
    $region29: #{tpu_custom_call.1} parent=1 // pred_fallthru
      _
    // Predicated region
    $region30: #{tpu_custom_call.1} parent=1 // pred_check
      _
    $region31: #{tpu_custom_call.1} parent=1 // pred_check_branch
      %50 = sbr.rel (0) target = $region33
    $region32: #{tpu_custom_call.1} parent=1 // pred_region
      %51 = dma.done [#allocation6], 2048
    $region33: #{tpu_custom_call.1} parent=1 // pred_fallthru
      _
    %v52 = vld [vmem:[%s0] sm:$0xff]
    %v53 = vlaneseq
    %v54 = vand.u32 %v53, 127
    %v55 = vld [vmem:[%s1] sm:$0xff]
    %56 = vset.pattern.permute.xlu0 0
    %57 = vperm.xlu0 %56, %v55
    %v58 = vpop.permute.xlu0 %57
    %vm59 = vcmp.eq.s32.totalorder %v58, %v54
    %v60 = vsel %vm59, 1, 0
    %v61 = vcvt.s32.f32 %v60
    %v62 = vld [vmem:[#allocation2] sm:$0xff]
    %v63 = vld [vmem:[#allocation2 + $0x8] sm:$0xff]
    %v64 = vld [vmem:[#allocation2 + $0x10] sm:$0xff]
    %v65 = vld [vmem:[#allocation2 + $0x18] sm:$0xff]
    %v66 = vld [vmem:[%s3] sm:$0xf]
    %vm67 = vcmask 31744
    %v69 = vsel %vm67, %v61, 0
    %vm71 = vcmask 1043456
    %v73 = vsel %vm71, %v66, 0
    %75 = vmatprep.subr.mxu0 0.0
    %76 = vmatpush1.msra.mxu0 %v73
    %77 = vmatprep.subr.mxu0 0.0
    %78 = vmatpush1.msra.mxu0 0.0
    %79 = vmatprep.subr.mxu0 0.0
    %80 = vmatpush1.msra.mxu0 0.0
    %81 = vmatprep.subr.mxu0 0.0
    %82 = vmatpush1.msra.mxu0 0.0
    %83 = vmatprep.subr.mxu0 0.0
    %84 = vmatpush1.msra.mxu0 0.0
    %85 = vmatprep.subr.mxu0 0.0
    %86 = vmatpush1.msra.mxu0 0.0
    %87 = vmatprep.subr.mxu0 0.0
    %88 = vmatpush1.msra.mxu0 0.0
    %89 = vmatprep.subr.mxu0 0.0
    %90 = vmatpush1.msra.mxu0 0.0
    %91 = vmatprep.subr.mxu0 0.0
    %92 = vmatpush1.msra.mxu0 0.0
    %93 = vmatprep.subr.mxu0 0.0
    %94 = vmatpush1.msra.mxu0 0.0
    %95 = vmatprep.subr.mxu0 0.0
    %96 = vmatpush1.msra.mxu0 0.0
    %97 = vmatprep.subr.mxu0 0.0
    %98 = vmatpush1.msra.mxu0 0.0
    %99 = vmatprep.subr.mxu0 0.0
    %100 = vmatpush1.msra.mxu0 0.0
    %101 = vmatprep.subr.mxu0 0.0
    %102 = vmatpush1.msra.mxu0 0.0
    %103 = vmatprep.subr.mxu0 0.0
    %104 = vmatpush1.msra.mxu0 0.0
    %105 = vmatprep.subr.mxu0 0.0
    %106 = vmatpush1.msra.mxu0 0.0
    %107 = vmatprep.subr.mxu0 0.0
    %108 = vmatpush1.msra.mxu0 0.0
    %109 = vmatprep.subr.mxu0 0.0
    %110 = vmatpush1.msra.mxu0 0.0
    %111 = vmatprep.subr.mxu0 0.0
    %112 = vmatpush1.msra.mxu0 0.0
    %113 = vmatprep.subr.mxu0 0.0
    %114 = vmatpush1.msra.mxu0 0.0
    %115 = vmatprep.subr.mxu0 0.0
    %116 = vmatpush1.msra.mxu0 0.0
    %117 = vmatprep.subr.mxu0 0.0
    %118 = vmatpush1.msra.mxu0 0.0
    %119 = vmatprep.subr.mxu0 0.0
    %120 = vmatpush1.msra.mxu0 0.0
    %121 = vmatprep.subr.mxu0 0.0
    %122 = vmatpush1.msra.mxu0 0.0
    %123 = vmatprep.subr.mxu0 0.0
    %124 = vmatpush1.msra.mxu0 0.0
    %125 = vmatprep.subr.mxu0 0.0
    %126 = vmatpush1.msra.mxu0 0.0
    %127 = vmatprep.subr.mxu0 0.0
    %128 = vmatpush1.msra.mxu0 0.0
    %129 = vmatprep.subr.mxu0 0.0
    %130 = vmatpush1.msra.mxu0 0.0
    %131 = vmatprep.subr.mxu0 0.0
    %132 = vmatpush1.msra.mxu0 0.0
    %133 = vmatprep.subr.mxu0 0.0
    %134 = vmatpush1.msra.mxu0 0.0
    %135 = vmatprep.subr.mxu0 0.0
    %136 = vmatpush1.msra.mxu0 0.0
    %137 = vmatprep.subr.mxu0 0.0
    %138 = vmatpush1.msra.mxu0 0.0
    %139 = vmatprep.mubr.f32.mxu0 0.0
    %140 = vmatmul.mubr.f32.gmra.mrb[0].mxu0 %v69
    %v141 = vpop.f32.mrb[0].mxu0
    %v142 = vadd.f32 0.0, %v141
    %v143 = vpop.f32.mrb[0].mxu0
    %144 = vdwg.mxu0
    %vm145 = vcmask 261120
    %v147 = vsel %vm145, %v52, 0
    %149 = vmatprep.subr.mxu0 0.0
    %150 = vmatpush1.msra.mxu0 %v62
    %151 = vmatprep.subr.mxu0 0.0
    %152 = vmatpush1.msra.mxu0 %v63
    %153 = vmatprep.subr.mxu0 0.0
    %154 = vmatpush1.msra.mxu0 %v64
    %155 = vmatprep.subr.mxu0 0.0
    %156 = vmatpush1.msra.mxu0 %v65
    %157 = vmatprep.subr.mxu0 0.0
    %158 = vmatpush1.msra.mxu0 0.0
    %159 = vmatprep.subr.mxu0 0.0
    %160 = vmatpush1.msra.mxu0 0.0
    %161 = vmatprep.subr.mxu0 0.0
    %162 = vmatpush1.msra.mxu0 0.0
    %163 = vmatprep.subr.mxu0 0.0
    %164 = vmatpush1.msra.mxu0 0.0
    %165 = vmatprep.subr.mxu0 0.0
    %166 = vmatpush1.msra.mxu0 0.0
    %167 = vmatprep.subr.mxu0 0.0
    %168 = vmatpush1.msra.mxu0 0.0
    %169 = vmatprep.subr.mxu0 0.0
    %170 = vmatpush1.msra.mxu0 0.0
    %171 = vmatprep.subr.mxu0 0.0
    %172 = vmatpush1.msra.mxu0 0.0
    %173 = vmatprep.subr.mxu0 0.0
    %174 = vmatpush1.msra.mxu0 0.0
    %175 = vmatprep.subr.mxu0 0.0
    %176 = vmatpush1.msra.mxu0 0.0
    %177 = vmatprep.subr.mxu0 0.0
    %178 = vmatpush1.msra.mxu0 0.0
    %179 = vmatprep.subr.mxu0 0.0
    %180 = vmatpush1.msra.mxu0 0.0
    %181 = vmatprep.subr.mxu0 0.0
    %182 = vmatpush1.msra.mxu0 0.0
    %183 = vmatprep.subr.mxu0 0.0
    %184 = vmatpush1.msra.mxu0 0.0
    %185 = vmatprep.subr.mxu0 0.0
    %186 = vmatpush1.msra.mxu0 0.0
    %187 = vmatprep.subr.mxu0 0.0
    %188 = vmatpush1.msra.mxu0 0.0
    %189 = vmatprep.subr.mxu0 0.0
    %190 = vmatpush1.msra.mxu0 0.0
    %191 = vmatprep.subr.mxu0 0.0
    %192 = vmatpush1.msra.mxu0 0.0
    %193 = vmatprep.subr.mxu0 0.0
    %194 = vmatpush1.msra.mxu0 0.0
    %195 = vmatprep.subr.mxu0 0.0
    %196 = vmatpush1.msra.mxu0 0.0
    %197 = vmatprep.subr.mxu0 0.0
    %198 = vmatpush1.msra.mxu0 0.0
    %199 = vmatprep.subr.mxu0 0.0
    %200 = vmatpush1.msra.mxu0 0.0
    %201 = vmatprep.subr.mxu0 0.0
    %202 = vmatpush1.msra.mxu0 0.0
    %203 = vmatprep.subr.mxu0 0.0
    %204 = vmatpush1.msra.mxu0 0.0
    %205 = vmatprep.subr.mxu0 0.0
    %206 = vmatpush1.msra.mxu0 0.0
    %207 = vmatprep.subr.mxu0 0.0
    %208 = vmatpush1.msra.mxu0 0.0
    %209 = vmatprep.subr.mxu0 0.0
    %210 = vmatpush1.msra.mxu0 0.0
    %211 = vmatprep.subr.mxu0 0.0
    %212 = vmatpush1.msra.mxu0 0.0
    %213 = vmatprep.mubr.f32.mxu0 0.0
    %214 = vmatmul.mubr.f32.gmra.mrb[0].mxu0 %v147
    %v215 = vpop.f32.mrb[0].mxu0
    %v216 = vadd.f32 %v142, %v215
    %v217 = vpop.f32.mrb[0].mxu0
    %218 = vdwg.mxu0
    %vm219 = vcmp.gt.f32.partialorder %v216, 0.0
    %v220 = vmul.f32 %v216, 0.2
    %v221 = vsel %vm219, %v216, %v220
    %v222 = vld [vmem:[#allocation5] sm:$0xff]
    %v223 = vld [vmem:[#allocation5 + $0x8] sm:$0xff]
    %v224 = vld [vmem:[#allocation5 + $0x10] sm:$0xff]
    %v225 = vld [vmem:[#allocation5 + $0x18] sm:$0xff]
    %v226 = vld [vmem:[#allocation5 + $0x20] sm:$0xff]
    %v227 = vld [vmem:[#allocation5 + $0x28] sm:$0xff]
    %v228 = vld [vmem:[#allocation5 + $0x30] sm:$0xff]
    %v229 = vld [vmem:[#allocation5 + $0x38] sm:$0xff]
    %v230 = vld [vmem:[#allocation5 + $0x40] sm:$0xff]
    %v231 = vld [vmem:[#allocation5 + $0x48] sm:$0xff]
    %v232 = vld [vmem:[#allocation5 + $0x50] sm:$0xff]
    %v233 = vld [vmem:[#allocation5 + $0x58] sm:$0xff]
    %v234 = vld [vmem:[#allocation5 + $0x60] sm:$0xff]
    %v235 = vld [vmem:[#allocation5 + $0x68] sm:$0xff]
    %v236 = vld [vmem:[#allocation5 + $0x70] sm:$0xff]
    %v237 = vld [vmem:[#allocation5 + $0x78] sm:$0xff]
    %v238 = vld [vmem:[%s5] sm:$0x1]
    %v240 = vlaneseq
    %v241 = vshrl.u32 %v240, 7
    %v242 = vsub.s32 0, %v241
    %v243 = vrot.slane %v238, %v242
    %245 = vmatprep.subr.mxu0 0.0
    %246 = vmatpush1.msra.mxu0 %v222
    %247 = vmatprep.subr.mxu0 0.0
    %248 = vmatpush1.msra.mxu0 %v223
    %249 = vmatprep.subr.mxu0 0.0
    %250 = vmatpush1.msra.mxu0 %v224
    %251 = vmatprep.subr.mxu0 0.0
    %252 = vmatpush1.msra.mxu0 %v225
    %253 = vmatprep.subr.mxu0 0.0
    %254 = vmatpush1.msra.mxu0 %v226
    %255 = vmatprep.subr.mxu0 0.0
    %256 = vmatpush1.msra.mxu0 %v227
    %257 = vmatprep.subr.mxu0 0.0
    %258 = vmatpush1.msra.mxu0 %v228
    %259 = vmatprep.subr.mxu0 0.0
    %260 = vmatpush1.msra.mxu0 %v229
    %261 = vmatprep.subr.mxu0 0.0
    %262 = vmatpush1.msra.mxu0 %v230
    %263 = vmatprep.subr.mxu0 0.0
    %264 = vmatpush1.msra.mxu0 %v231
    %265 = vmatprep.subr.mxu0 0.0
    %266 = vmatpush1.msra.mxu0 %v232
    %267 = vmatprep.subr.mxu0 0.0
    %268 = vmatpush1.msra.mxu0 %v233
    %269 = vmatprep.subr.mxu0 0.0
    %270 = vmatpush1.msra.mxu0 %v234
    %271 = vmatprep.subr.mxu0 0.0
    %272 = vmatpush1.msra.mxu0 %v235
    %273 = vmatprep.subr.mxu0 0.0
    %274 = vmatpush1.msra.mxu0 %v236
    %275 = vmatprep.subr.mxu0 0.0
    %276 = vmatpush1.msra.mxu0 %v237
    %277 = vmatprep.subr.mxu0 0.0
    %278 = vmatpush1.msra.mxu0 0.0
    %279 = vmatprep.subr.mxu0 0.0
    %280 = vmatpush1.msra.mxu0 0.0
    %281 = vmatprep.subr.mxu0 0.0
    %282 = vmatpush1.msra.mxu0 0.0
    %283 = vmatprep.subr.mxu0 0.0
    %284 = vmatpush1.msra.mxu0 0.0
    %285 = vmatprep.subr.mxu0 0.0
    %286 = vmatpush1.msra.mxu0 0.0
    %287 = vmatprep.subr.mxu0 0.0
    %288 = vmatpush1.msra.mxu0 0.0
    %289 = vmatprep.subr.mxu0 0.0
    %290 = vmatpush1.msra.mxu0 0.0
    %291 = vmatprep.subr.mxu0 0.0
    %292 = vmatpush1.msra.mxu0 0.0
    %293 = vmatprep.subr.mxu0 0.0
    %294 = vmatpush1.msra.mxu0 0.0
    %295 = vmatprep.subr.mxu0 0.0
    %296 = vmatpush1.msra.mxu0 0.0
    %297 = vmatprep.subr.mxu0 0.0
    %298 = vmatpush1.msra.mxu0 0.0
    %299 = vmatprep.subr.mxu0 0.0
    %300 = vmatpush1.msra.mxu0 0.0
    %301 = vmatprep.subr.mxu0 0.0
    %302 = vmatpush1.msra.mxu0 0.0
    %303 = vmatprep.subr.mxu0 0.0
    %304 = vmatpush1.msra.mxu0 0.0
    %305 = vmatprep.subr.mxu0 0.0
    %306 = vmatpush1.msra.mxu0 0.0
    %307 = vmatprep.subr.mxu0 0.0
    %308 = vmatpush1.msra.mxu0 0.0
    %309 = vmatprep.mubr.f32.mxu0 0.0
    %310 = vmatmul.mubr.f32.gmra.mrb[0].mxu0 %v221
    %v311 = vpop.f32.mrb[0].mxu0
    %v312 = vadd.f32 %v243, %v311
    %v313 = vpop.f32.mrb[0].mxu0
    %314 = vdwg.mxu0
    %315 = vst [vmem:[#allocation7] sm:$0xff] %v312
    // Predicated region
    $region34: #{tpu_custom_call.1} parent=1 // pred_check
      _
    $region35: #{tpu_custom_call.1} parent=1 // pred_check_branch
      %317 = sbr.rel (0) target = $region37
    $region36: #{tpu_custom_call.1} parent=1 // pred_region
      %s319 = ssub.s32 128, 128
      %320 = vsyncadd [#allocation4], %s319
      %s322 = sshll.u32 [#allocation7], 4
      %s323 = int_to_ptr.vmem [resolvable:$true] %s322
      %325 = dma.vmem_to_hbm [thread:$0]  %s323, 128, %s6, [#allocation4]
    $region37: #{tpu_custom_call.1} parent=1 // pred_fallthru
      _
    // Predicated region
    $region38: #{tpu_custom_call.1} parent=1 // pred_check
      _
    $region39: #{tpu_custom_call.1} parent=1 // pred_check_branch
      %327 = sbr.rel (0) target = $region41
    $region40: #{tpu_custom_call.1} parent=1 // pred_region
      %328 = dma.done [#allocation4], 128
    $region41: #{tpu_custom_call.1} parent=1 // pred_fallthru
      _
    %329 = vsyncpa [#allocation3], 1
    %330 = vsyncpa [#allocation6], 1
    %331 = vsyncpa [#allocation4], 1

</llo_original>
